<compile_context>
chip_gen: v6e
topology: v6e:2x2x1
jax: 0.10.0
libtpu: 0.0.40
codegen_flags: <defaults>
</compile_context>

<pallas_src>
import jax
import jax.numpy as jnp
from jax.experimental import pallas as pl
from jax.experimental.pallas import tpu as pltpu


def _mlp_kernel(x_ref, w1x_ref, b1_ref, w2_ref, b2_ref, o_ref):
    # First linear layer (time column already folded into b1 on the host side).
    h = jnp.dot(x_ref[...], w1x_ref[...], preferred_element_type=jnp.float32)
    h = jnp.tanh(h + b1_ref[...])
    # Second linear layer.
    out = jnp.dot(h, w2_ref[...], preferred_element_type=jnp.float32) + b2_ref[...]
    o_ref[...] = out.astype(o_ref.dtype)


def _torch_wrapper_forward_impl(t, x, params, tm=2048):
    """t: scalar float, x: (B, S, D). Returns (B, S, D)."""
    w1, b1, w2, b2 = params["w1"], params["b1"], params["w2"], params["b2"]
    B, S, D = x.shape
    H = w1.shape[1]
    M = B * S
    x2d = x.reshape(M, D)  # contiguous reshape; free.

    # Fold the time conditioning into the first-layer bias (once per call,
    # outside the row-tile loop):  [x, t] @ W1 + b1 = x @ W1[:D] + (b1 + t*W1[D]).
    t_val = jnp.asarray(t, dtype=jnp.float32)
    w1x = w1[:D, :].astype(x.dtype)                                  # (D, H)
    bias1 = (b1.astype(jnp.float32) + t_val * w1[D, :].astype(jnp.float32))
    bias1 = bias1.reshape(1, H).astype(x.dtype)                      # (1, H)
    w2c = w2.astype(x.dtype)                                         # (H, D)
    b2r = b2.reshape(1, D).astype(x.dtype)                           # (1, D)

    # Row-tile size: the full M when small (full-dim blocks are always legal),
    # otherwise `tm` rows (multiple of 8). Per-step pipeline overhead is ~0.35us,
    # so bigger tiles amortise it; working set stays tiny even on v7x (64 MiB).
    TM = M if M <= tm else tm
    grid_m = pl.cdiv(M, TM)

    cost = pl.CostEstimate(
        flops=4 * M * D * H,                # two matmuls, 2*M*D*H flops each
        transcendentals=M * H,              # tanh
        bytes_accessed=4 * (2 * M * D + D * H + H * D + H + D),
    )

    out2d = pl.pallas_call(
        _mlp_kernel,
        out_shape=jax.ShapeDtypeStruct((M, D), x.dtype),
        grid=(grid_m,),
        in_specs=[
            pl.BlockSpec((TM, D), lambda i: (i, 0)),        # x row tile (pipelined)
            pl.BlockSpec((D, H), lambda i: (0, 0)),         # W1[:D]  (VMEM-resident)
            pl.BlockSpec((1, H), lambda i: (0, 0)),         # b1 + t*W1[D] (resident)
            pl.BlockSpec((H, D), lambda i: (0, 0)),         # W2      (VMEM-resident)
            pl.BlockSpec((1, D), lambda i: (0, 0)),         # b2      (resident)
        ],
        out_specs=pl.BlockSpec((TM, D), lambda i: (i, 0)),
        compiler_params=pltpu.CompilerParams(
            dimension_semantics=("parallel",),              # megacore split on v7x
        ),
        cost_estimate=cost,
    )(x2d, w1x, bias1, w2c, b2r)

    return out2d.reshape(B, S, D)


torch_wrapper_forward = jax.jit(_torch_wrapper_forward_impl, static_argnames=("tm",))


def _reference_forward(t, x, params):
    """Pure-JAX reference mirroring the PyTorch semantics (explicit concat)."""
    B, S, D = x.shape
    t_expanded = jnp.full((B, S, 1), t, dtype=x.dtype)
    xt = jnp.concatenate([x, t_expanded], axis=-1)          # (B, S, D+1)
    h = jnp.tanh(xt @ params["w1"] + params["b1"])
    return h @ params["w2"] + params["b2"]


def init_params(key, d_in, hidden):
    k1, k2, k3, k4 = jax.random.split(key, 4)
    return {
        "w1": jax.random.normal(k1, (d_in + 1, hidden), jnp.float32) * 0.1,
        "b1": jax.random.normal(k2, (hidden,), jnp.float32) * 0.1,
        "w2": jax.random.normal(k3, (hidden, d_in), jnp.float32) * 0.1,
        "b2": jax.random.normal(k4, (d_in,), jnp.float32) * 0.1,
    }


if __name__ == "__main__":
    B, S, D, H = 2, 8, 4, 32
    key = jax.random.PRNGKey(0)
    kx, kp = jax.random.split(key)
    x = jax.random.normal(kx, (B, S, D), jnp.float32)
    t = jnp.float32(0.37)
    params = init_params(kp, D, H)

    out = torch_wrapper_forward(t, x, params)
    out = jax.block_until_ready(out)

    ref = _reference_forward(t, x, params)
    assert out.shape == (B, S, D)
    assert jnp.allclose(out, ref, atol=1e-5, rtol=1e-5), (
        f"max err {jnp.max(jnp.abs(out - ref))}"
    )
    print("KERNEL_OK")
</pallas_src>

<mosaic_0001>
module attributes {stable_mosaic.version = 11 : i64} {
  func.func @_mlp_kernel(%arg0: i32, %arg1: memref<16x4xf32, #tpu.memory_space<vmem>>, %arg2: memref<4x32xf32, #tpu.memory_space<vmem>>, %arg3: memref<1x32xf32, #tpu.memory_space<vmem>>, %arg4: memref<32x4xf32, #tpu.memory_space<vmem>>, %arg5: memref<1x4xf32, #tpu.memory_space<vmem>>, %arg6: memref<16x4xf32, #tpu.memory_space<vmem>>) attributes {dimension_semantics = [#tpu.dimension_semantics<parallel>], iteration_bounds = array<i64: 1>, scalar_prefetch = 0 : i64, scratch_operands = 0 : i64, tpu.core_type = #tpu.core_type<tc>, window_params = [{transform_indices = @transform_0, window_bounds = array<i64: 16, 4>}, {pipeline_mode = #tpu.pipeline_mode<synchronous>, transform_indices = @transform_1, window_bounds = array<i64: 4, 32>}, {pipeline_mode = #tpu.pipeline_mode<synchronous>, transform_indices = @transform_2, window_bounds = array<i64: 1, 32>}, {pipeline_mode = #tpu.pipeline_mode<synchronous>, transform_indices = @transform_3, window_bounds = array<i64: 32, 4>}, {pipeline_mode = #tpu.pipeline_mode<synchronous>, transform_indices = @transform_4, window_bounds = array<i64: 1, 4>}, {transform_indices = @transform_5, window_bounds = array<i64: 16, 4>}]} {
    %c0 = arith.constant 0 : index
    %c0_0 = arith.constant 0 : index
    %0 = vector.load %arg1[%c0, %c0_0] : memref<16x4xf32, #tpu.memory_space<vmem>>, vector<16x4xf32>
    %c0_1 = arith.constant 0 : index
    %c0_2 = arith.constant 0 : index
    %1 = vector.load %arg2[%c0_1, %c0_2] : memref<4x32xf32, #tpu.memory_space<vmem>>, vector<4x32xf32>
    %cst = arith.constant dense<0.000000e+00> : vector<16x32xf32>
    %2 = tpu.matmul %0, %1, %cst {dimension_numbers = #tpu.dot_dimension_numbers<[1], [0], [0], [1], [0, 0, 1, 1], [], []>} : vector<16x4xf32>, vector<4x32xf32>, vector<16x32xf32> -> vector<16x32xf32>
    %c0_3 = arith.constant 0 : index
    %c0_4 = arith.constant 0 : index
    %3 = vector.load %arg3[%c0_3, %c0_4] : memref<1x32xf32, #tpu.memory_space<vmem>>, vector<1x32xf32>
    %4 = vector.broadcast %3 : vector<1x32xf32> to vector<16x32xf32>
    %5 = arith.addf %2, %4 : vector<16x32xf32>
    %6 = math.tanh %5 : vector<16x32xf32>
    %c0_5 = arith.constant 0 : index
    %c0_6 = arith.constant 0 : index
    %7 = vector.load %arg4[%c0_5, %c0_6] : memref<32x4xf32, #tpu.memory_space<vmem>>, vector<32x4xf32>
    %cst_7 = arith.constant dense<0.000000e+00> : vector<16x4xf32>
    %8 = tpu.matmul %6, %7, %cst_7 {dimension_numbers = #tpu.dot_dimension_numbers<[1], [0], [0], [1], [0, 0, 1, 1], [], []>} : vector<16x32xf32>, vector<32x4xf32>, vector<16x4xf32> -> vector<16x4xf32>
    %c0_8 = arith.constant 0 : index
    %c0_9 = arith.constant 0 : index
    %9 = vector.load %arg5[%c0_8, %c0_9] : memref<1x4xf32, #tpu.memory_space<vmem>>, vector<1x4xf32>
    %10 = vector.broadcast %9 : vector<1x4xf32> to vector<16x4xf32>
    %11 = arith.addf %8, %10 : vector<16x4xf32>
    %c0_10 = arith.constant 0 : index
    %c0_11 = arith.constant 0 : index
    %12 = vector.load %arg6[%c0_10, %c0_11] : memref<16x4xf32, #tpu.memory_space<vmem>>, vector<16x4xf32>
    tpu.vector_store %arg6[%c0_10, %c0_11], %11 {strides = array<i32>} : memref<16x4xf32, #tpu.memory_space<vmem>>, vector<16x4xf32>,
    return
  }
  func.func @transform_0(%arg0: i32) -> (i32, i32) {
    %c0_i32 = arith.constant 0 : i32
    %c0_i32_0 = arith.constant 0 : i32
    return %arg0, %c0_i32 : i32, i32
  }
  func.func @transform_1(%arg0: i32) -> (i32, i32) {
    %c0_i32 = arith.constant 0 : i32
    %c0_i32_0 = arith.constant 0 : i32
    %c0_i32_1 = arith.constant 0 : i32
    return %c0_i32, %c0_i32_0 : i32, i32
  }
  func.func @transform_2(%arg0: i32) -> (i32, i32) {
    %c0_i32 = arith.constant 0 : i32
    %c0_i32_0 = arith.constant 0 : i32
    %c0_i32_1 = arith.constant 0 : i32
    return %c0_i32, %c0_i32_0 : i32, i32
  }
  func.func @transform_3(%arg0: i32) -> (i32, i32) {
    %c0_i32 = arith.constant 0 : i32
    %c0_i32_0 = arith.constant 0 : i32
    %c0_i32_1 = arith.constant 0 : i32
    return %c0_i32, %c0_i32_0 : i32, i32
  }
  func.func @transform_4(%arg0: i32) -> (i32, i32) {
    %c0_i32 = arith.constant 0 : i32
    %c0_i32_0 = arith.constant 0 : i32
    %c0_i32_1 = arith.constant 0 : i32
    return %c0_i32, %c0_i32_0 : i32, i32
  }
  func.func @transform_5(%arg0: i32) -> (i32, i32) {
    %c0_i32 = arith.constant 0 : i32
    %c0_i32_0 = arith.constant 0 : i32
    return %arg0, %c0_i32 : i32, i32
  }
}

</mosaic_0001>

<llo_original>
// kernel: _torch_wrapper_forward_impl.1
$region0: #{_torch_wrapper_forward_impl.1}
  #allocation0 [shape = 'u32[]', space=smem, size = 0x4, offset = 0x4, fixed_abs, tag = 'smem constant byte address 0x4 - core index']
  #allocation1 [shape = 'u32[144,128]{1,0:T(1,128)}', space=vmem, size = 0x12000, scoped, tag = 'internal scratch']
  %s0 = inlined_call_operand.vmem [shape: f32[16,4], index: 0, kind: input, shape index: {}]
  %s1 = inlined_call_operand.vmem [shape: f32[4,32], index: 1, kind: input, shape index: {}]
  %s2 = inlined_call_operand.vmem [shape: f32[1,32], index: 2, kind: input, shape index: {}]
  %s3 = inlined_call_operand.vmem [shape: f32[32,4], index: 3, kind: input, shape index: {}]
  %s4 = inlined_call_operand.vmem [shape: f32[1,4], index: 4, kind: input, shape index: {}]
  %s5 = inlined_call_operand.vmem [shape: f32[16,4], index: 5, kind: output, shape index: {}]
  %s6 = sld [smem:[#allocation0]]
  $region30: #{_torch_wrapper_forward_impl.1} parent=0
    _
  %s8 = ssub.s32 1, %s6
  %s9 = scalar_select 0, %s8, %s6
  // Predicated region
  $region2: #{_torch_wrapper_forward_impl.1} parent=0 // pred_check
    _
  $region3: #{_torch_wrapper_forward_impl.1} parent=0 // pred_check_branch
    %11 = sbr.rel (0) target = $region5
  $region4: #{_torch_wrapper_forward_impl.1} parent=0 // pred_region
    _
  $region5: #{_torch_wrapper_forward_impl.1} parent=0 // pred_fallthru
    _
  // Predicated region
  $region6: #{_torch_wrapper_forward_impl.1} parent=0 // pred_check
    _
  $region7: #{_torch_wrapper_forward_impl.1} parent=0 // pred_check_branch
    %13 = sbr.rel (0) target = $region9
  $region8: #{_torch_wrapper_forward_impl.1} parent=0 // pred_region
    _
  $region9: #{_torch_wrapper_forward_impl.1} parent=0 // pred_fallthru
    _
  // Predicated region
  $region10: #{_torch_wrapper_forward_impl.1} parent=0 // pred_check
    _
  $region11: #{_torch_wrapper_forward_impl.1} parent=0 // pred_check_branch
    %15 = sbr.rel (0) target = $region13
  $region12: #{_torch_wrapper_forward_impl.1} parent=0 // pred_region
    _
  $region13: #{_torch_wrapper_forward_impl.1} parent=0 // pred_fallthru
    _
  // Predicated region
  $region14: #{_torch_wrapper_forward_impl.1} parent=0 // pred_check
    _
  $region15: #{_torch_wrapper_forward_impl.1} parent=0 // pred_check_branch
    %17 = sbr.rel (0) target = $region17
  $region16: #{_torch_wrapper_forward_impl.1} parent=0 // pred_region
    _
  $region17: #{_torch_wrapper_forward_impl.1} parent=0 // pred_fallthru
    _
  // Predicated region
  $region18: #{_torch_wrapper_forward_impl.1} parent=0 // pred_check
    _
  $region19: #{_torch_wrapper_forward_impl.1} parent=0 // pred_check_branch
    %19 = sbr.rel (0) target = $region21
  $region20: #{_torch_wrapper_forward_impl.1} parent=0 // pred_region
    _
  $region21: #{_torch_wrapper_forward_impl.1} parent=0 // pred_fallthru
    _
  %v20 = vld [vmem:[%s0] sm:$0xff]
  %v21 = vld [vmem:[%s0 + $0x8] sm:$0xff]
  %v22 = vld [vmem:[%s1] sm:$0xf]
  %v23 = vld [vmem:[%s2] sm:$0x1]
  %v25 = vlaneseq
  %v26 = vshrl.u32 %v25, 7
  %v27 = vsub.s32 0, %v26
  %v28 = vrot.slane %v23, %v27
  %vm30 = vcmask 31744
  %v32 = vsel %vm30, %v20, 0
  %v35 = vsel %vm30, %v21, 0
  %vm37 = vcmask 1043456
  %v39 = vsel %vm37, %v22, 0
  %41 = vmatprep.subr.mxu0 0.0
  %42 = vmatpush1.msra.mxu0 0.0
  %43 = vmatprep.subr.mxu0 0.0
  %44 = vmatpush1.msra.mxu0 0.0
  %45 = vmatprep.subr.mxu0 0.0
  %46 = vmatpush1.msra.mxu0 0.0
  %47 = vmatprep.subr.mxu0 0.0
  %48 = vmatpush1.msra.mxu0 0.0
  %49 = vmatprep.subr.mxu0 0.0
  %50 = vmatpush1.msra.mxu0 0.0
  %51 = vmatprep.subr.mxu0 0.0
  %52 = vmatpush1.msra.mxu0 0.0
  %53 = vmatprep.subr.mxu0 0.0
  %54 = vmatpush1.msra.mxu0 0.0
  %55 = vmatprep.subr.mxu0 0.0
  %56 = vmatpush1.msra.mxu0 0.0
  %57 = vmatprep.subr.mxu0 0.0
  %58 = vmatpush1.msra.mxu0 0.0
  %59 = vmatprep.subr.mxu0 0.0
  %60 = vmatpush1.msra.mxu0 0.0
  %61 = vmatprep.subr.mxu0 0.0
  %62 = vmatpush1.msra.mxu0 0.0
  %63 = vmatprep.subr.mxu0 0.0
  %64 = vmatpush1.msra.mxu0 0.0
  %65 = vmatprep.subr.mxu0 0.0
  %66 = vmatpush1.msra.mxu0 0.0
  %67 = vmatprep.subr.mxu0 0.0
  %68 = vmatpush1.msra.mxu0 0.0
  %69 = vmatprep.subr.mxu0 0.0
  %70 = vmatpush1.msra.mxu0 0.0
  %71 = vmatprep.subr.mxu0 0.0
  %72 = vmatpush1.msra.mxu0 %v39
  %73 = vmatprep.subr.mxu0 0.0
  %74 = vmatpush2.msra.mxu0 0.0
  %75 = vmatprep.subr.mxu0 0.0
  %76 = vmatpush2.msra.mxu0 0.0
  %77 = vmatprep.subr.mxu0 0.0
  %78 = vmatpush2.msra.mxu0 0.0
  %79 = vmatprep.subr.mxu0 0.0
  %80 = vmatpush2.msra.mxu0 0.0
  %81 = vmatprep.subr.mxu0 0.0
  %82 = vmatpush2.msra.mxu0 0.0
  %83 = vmatprep.subr.mxu0 0.0
  %84 = vmatpush2.msra.mxu0 0.0
  %85 = vmatprep.subr.mxu0 0.0
  %86 = vmatpush2.msra.mxu0 0.0
  %87 = vmatprep.subr.mxu0 0.0
  %88 = vmatpush2.msra.mxu0 0.0
  %89 = vmatprep.subr.mxu0 0.0
  %90 = vmatpush2.msra.mxu0 0.0
  %91 = vmatprep.subr.mxu0 0.0
  %92 = vmatpush2.msra.mxu0 0.0
  %93 = vmatprep.subr.mxu0 0.0
  %94 = vmatpush2.msra.mxu0 0.0
  %95 = vmatprep.subr.mxu0 0.0
  %96 = vmatpush2.msra.mxu0 0.0
  %97 = vmatprep.subr.mxu0 0.0
  %98 = vmatpush2.msra.mxu0 0.0
  %99 = vmatprep.subr.mxu0 0.0
  %100 = vmatpush2.msra.mxu0 0.0
  %101 = vmatprep.subr.mxu0 0.0
  %102 = vmatpush2.msra.mxu0 0.0
  %103 = vmatprep.subr.mxu0 0.0
  %104 = vmatpush2.msra.mxu0 0.0
  %105 = vmatprep.mubr.f32.mxu0 0.0
  %106 = vmatmul.mubr.f32.gmra.mxu0 %v32
  %v107 = vpop.f32.mrf.mxu0
  %v108 = vadd.f32 %v28, %v107
  %v109 = vpop.f32.mrf.mxu0
  %110 = vmatprep.mubr.f32.mxu0 0.0
  %111 = vmatmul.mubr.f32.gmra.mxu0 %v35
  %v112 = vpop.f32.mrf.mxu0
  %v113 = vadd.f32 %v28, %v112
  %v114 = vpop.f32.mrf.mxu0
  %115 = vdwg.mxu0
  %v116 = vtanh.pop %v108
  %v117 = vtanh.pop %v113
  %v118 = vld [vmem:[%s3] sm:$0xff]
  %v119 = vld [vmem:[%s3 + $0x8] sm:$0xff]
  %v120 = vld [vmem:[%s3 + $0x10] sm:$0xff]
  %v121 = vld [vmem:[%s3 + $0x18] sm:$0xff]
  %v122 = vld [vmem:[%s4] sm:$0x1]
  %v124 = vlaneseq
  %v125 = vshrl.u32 %v124, 7
  %v126 = vsub.s32 0, %v125
  %v127 = vrot.slane %v122, %v126
  %vm129 = vcmask 261120
  %v131 = vsel %vm129, %v116, 0
  %v134 = vsel %vm129, %v117, 0
  %136 = vmatprep.subr.mxu0 0.0
  %137 = vmatpush1.msra.mxu0 0.0
  %138 = vmatprep.subr.mxu0 0.0
  %139 = vmatpush1.msra.mxu0 0.0
  %140 = vmatprep.subr.mxu0 0.0
  %141 = vmatpush1.msra.mxu0 0.0
  %142 = vmatprep.subr.mxu0 0.0
  %143 = vmatpush1.msra.mxu0 0.0
  %144 = vmatprep.subr.mxu0 0.0
  %145 = vmatpush1.msra.mxu0 0.0
  %146 = vmatprep.subr.mxu0 0.0
  %147 = vmatpush1.msra.mxu0 0.0
  %148 = vmatprep.subr.mxu0 0.0
  %149 = vmatpush1.msra.mxu0 0.0
  %150 = vmatprep.subr.mxu0 0.0
  %151 = vmatpush1.msra.mxu0 0.0
  %152 = vmatprep.subr.mxu0 0.0
  %153 = vmatpush1.msra.mxu0 0.0
  %154 = vmatprep.subr.mxu0 0.0
  %155 = vmatpush1.msra.mxu0 0.0
  %156 = vmatprep.subr.mxu0 0.0
  %157 = vmatpush1.msra.mxu0 0.0
  %158 = vmatprep.subr.mxu0 0.0
  %159 = vmatpush1.msra.mxu0 0.0
  %160 = vmatprep.subr.mxu0 0.0
  %161 = vmatpush1.msra.mxu0 %v121
  %162 = vmatprep.subr.mxu0 0.0
  %163 = vmatpush1.msra.mxu0 %v120
  %164 = vmatprep.subr.mxu0 0.0
  %165 = vmatpush1.msra.mxu0 %v119
  %166 = vmatprep.subr.mxu0 0.0
  %167 = vmatpush1.msra.mxu0 %v118
  %168 = vmatprep.subr.mxu0 0.0
  %169 = vmatpush2.msra.mxu0 0.0
  %170 = vmatprep.subr.mxu0 0.0
  %171 = vmatpush2.msra.mxu0 0.0
  %172 = vmatprep.subr.mxu0 0.0
  %173 = vmatpush2.msra.mxu0 0.0
  %174 = vmatprep.subr.mxu0 0.0
  %175 = vmatpush2.msra.mxu0 0.0
  %176 = vmatprep.subr.mxu0 0.0
  %177 = vmatpush2.msra.mxu0 0.0
  %178 = vmatprep.subr.mxu0 0.0
  %179 = vmatpush2.msra.mxu0 0.0
  %180 = vmatprep.subr.mxu0 0.0
  %181 = vmatpush2.msra.mxu0 0.0
  %182 = vmatprep.subr.mxu0 0.0
  %183 = vmatpush2.msra.mxu0 0.0
  %184 = vmatprep.subr.mxu0 0.0
  %185 = vmatpush2.msra.mxu0 0.0
  %186 = vmatprep.subr.mxu0 0.0
  %187 = vmatpush2.msra.mxu0 0.0
  %188 = vmatprep.subr.mxu0 0.0
  %189 = vmatpush2.msra.mxu0 0.0
  %190 = vmatprep.subr.mxu0 0.0
  %191 = vmatpush2.msra.mxu0 0.0
  %192 = vmatprep.subr.mxu0 0.0
  %193 = vmatpush2.msra.mxu0 0.0
  %194 = vmatprep.subr.mxu0 0.0
  %195 = vmatpush2.msra.mxu0 0.0
  %196 = vmatprep.subr.mxu0 0.0
  %197 = vmatpush2.msra.mxu0 0.0
  %198 = vmatprep.subr.mxu0 0.0
  %199 = vmatpush2.msra.mxu0 0.0
  %200 = vmatprep.mubr.f32.mxu0 0.0
  %201 = vmatmul.mubr.f32.gmra.mxu0 %v131
  %v202 = vpop.f32.mrf.mxu0
  %v203 = vadd.f32 %v127, %v202
  %v204 = vpop.f32.mrf.mxu0
  %205 = vmatprep.mubr.f32.mxu0 0.0
  %206 = vmatmul.mubr.f32.gmra.mxu0 %v134
  %v207 = vpop.f32.mrf.mxu0
  %v208 = vadd.f32 %v127, %v207
  %v209 = vpop.f32.mrf.mxu0
  %210 = vdwg.mxu0
  %211 = vst.msk [vmem:[%s5] sm:$0xff] %vm30, %v203
  %212 = vst.msk [vmem:[%s5 + $0x8] sm:$0xff] %vm30, %v208
  // Predicated region
  $region22: #{_torch_wrapper_forward_impl.1} parent=0 // pred_check
    _
  $region23: #{_torch_wrapper_forward_impl.1} parent=0 // pred_check_branch
    %214 = sbr.rel (0) target = $region25
  $region24: #{_torch_wrapper_forward_impl.1} parent=0 // pred_region
    _
  $region25: #{_torch_wrapper_forward_impl.1} parent=0 // pred_fallthru
    _
  // Predicated region
  $region26: #{_torch_wrapper_forward_impl.1} parent=0 // pred_check
    _
  $region27: #{_torch_wrapper_forward_impl.1} parent=0 // pred_check_branch
    %216 = sbr.rel (0) target = $region29
  $region28: #{_torch_wrapper_forward_impl.1} parent=0 // pred_region
    _
  $region29: #{_torch_wrapper_forward_impl.1} parent=0 // pred_fallthru
    _

</llo_original>
